<compile_context>
chip_gen: v6e
topology: v6e:2x2x1
jax: 0.10.0
libtpu: 0.0.40
codegen_flags: <defaults>
</compile_context>

<pallas_src>
import functools

import jax
import jax.numpy as jnp
from jax.experimental import pallas as pl
from jax.experimental.pallas import tpu as pltpu


def _round_up(x, m):
    return ((x + m - 1) // m) * m


# ----------------------------------------------------------------------------
# Primary path: row replication as a lane-dense MXU matmul.
# ----------------------------------------------------------------------------
def _rep_matmul_kernel(x_ref, m_ref, o_ref, *, split_f32):
    """o = x @ M, M a static one-hot replication matrix (bf16).

    x_ref: (TG, K) row groups; m_ref: (K, K*f*f); o_ref: (TG, K*f*f).
    """
    m = m_ref[...]
    if split_f32:
        # Exact replication for f32/f16 using plain bf16 MXU passes:
        # x == x1 + x2 + x3 holds bit-exactly, each one-hot matmul only places
        # the parts, and the f32 accumulation reconstructs x exactly.
        x = x_ref[...].astype(jnp.float32)
        x1 = x.astype(jnp.bfloat16)
        r1 = x - x1.astype(jnp.float32)
        x2 = r1.astype(jnp.bfloat16)
        x3 = (r1 - x2.astype(jnp.float32)).astype(jnp.bfloat16)
        acc = jnp.dot(x1, m, preferred_element_type=jnp.float32)
        acc = acc + jnp.dot(x2, m, preferred_element_type=jnp.float32)
        acc = acc + jnp.dot(x3, m, preferred_element_type=jnp.float32)
    else:  # bf16 input: a single native pass is already exact.
        acc = jnp.dot(x_ref[...], m, preferred_element_type=jnp.float32)
    o_ref[...] = acc.astype(o_ref.dtype)


def _pick_row_group(total_rows, w, max_k=256):
    """Rows per group RG: RG | total_rows, RG*W <= max_k, prefer RG*W % 128 == 0."""
    if w > max_k:
        return None
    best = 1
    for rg in range(1, max_k // w + 1):
        if total_rows % rg:
            continue
        if (rg * w) % 128 == 0:
            return rg          # smallest lane-dense group -> smallest matrix
        best = rg              # otherwise: largest group that still fits
    return best


def _pick_rows_per_step(g, out_row_bytes, itemsize,
                        target_tile_bytes=4 << 20,
                        min_tile_bytes=1 << 20,
                        min_blocks=8):
    """~4 MiB output tiles; keep a few grid blocks (megacore / pipelining) as
    long as tiles stay >= 1 MiB; keep blocks sublane-aligned for the dtype."""
    sub = max(8, 32 // max(1, itemsize))
    cap = max(1, target_tile_bytes // max(1, out_row_bytes))
    par = pl.cdiv(g, min_blocks)
    floor_rows = max(1, min_tile_bytes // max(1, out_row_bytes))
    tg = min(g, cap, max(par, floor_rows))
    if tg < g:
        tg = min(g, max(sub, (tg // sub) * sub))
    return tg


def _upscale2d_rowrep_mxu(x, factor, rg):
    n, c, h, w = x.shape
    f = factor
    itemsize = x.dtype.itemsize
    rows = n * c * h
    g = rows // rg
    k = rg * w
    ko = k * f * f

    # Static 0/1 replication matrix:
    #   M[r*W + wi, r*W*f*f + j*W*f + wi*f + kk] = 1   for all j, kk in [0, f).
    cin = jnp.arange(k, dtype=jnp.int32)
    cout = jnp.arange(ko, dtype=jnp.int32)
    same_row = (cin[:, None] // w) == (cout[None, :] // (w * f * f))
    same_col = (cin[:, None] % w) == ((cout[None, :] % (w * f)) // f)
    rep = (same_row & same_col).astype(jnp.bfloat16)

    # Free (contiguous) reshapes; the (G, KO) result bytes are exactly the
    # NCHW output bytes.
    x2 = x.reshape(g, k)

    k_pad = _round_up(k, 128)
    ko_pad = _round_up(ko, 128)
    tg = _pick_rows_per_step(g, ko_pad * itemsize, itemsize)
    num_blocks = pl.cdiv(g, tg)

    # VMEM budget tied to actual usage (double-buffered in/out, resident
    # matrix, f32 accumulator) + margin, instead of a blanket 48 MiB.
    tg_pad = _round_up(tg, 8)
    in_tile = tg_pad * k_pad * itemsize
    out_tile = tg_pad * ko_pad * itemsize
    m_tile = _round_up(k, 8) * ko_pad * 2
    acc_tile = tg_pad * ko_pad * 4
    vmem_limit = 2 * (in_tile + out_tile) + 2 * m_tile + acc_tile + (4 << 20)
    vmem_limit = max(vmem_limit, 16 << 20)

    split_f32 = x.dtype.name != "bfloat16"
    n_passes = 3 if split_f32 else 1
    cost = pl.CostEstimate(
        flops=2 * g * k * ko * n_passes,
        transcendentals=0,
        bytes_accessed=(1 + f * f) * rows * w * itemsize + k * ko * 2,
    )

    out2 = pl.pallas_call(
        functools.partial(_rep_matmul_kernel, split_f32=split_f32),
        out_shape=jax.ShapeDtypeStruct((g, ko), x.dtype),
        grid=(num_blocks,),
        in_specs=[
            pl.BlockSpec((tg, k), lambda i: (i, 0)),
            pl.BlockSpec((k, ko), lambda i: (0, 0)),   # resident, fetched once
        ],
        out_specs=pl.BlockSpec((tg, ko), lambda i: (i, 0)),
        compiler_params=pltpu.CompilerParams(
            dimension_semantics=("parallel",),
            vmem_limit_bytes=int(vmem_limit),
        ),
        cost_estimate=cost,
    )(x2, rep)
    return out2.reshape(n, c, h * f, w * f)


# ----------------------------------------------------------------------------
# Secondary path: VPU broadcast kernel (non-float dtypes, or very wide images
# where W*factor is already lane-dense).  NC- and H-blocked.
# ----------------------------------------------------------------------------
def _upscale_bcast_kernel(x_ref, o_ref, *, factor):
    x = x_ref[...]                                   # (TB, TH, W)
    tb, th, w = x.shape
    y = jnp.broadcast_to(x[:, :, None, :], (tb, th, factor, w))
    y = y.reshape(tb, th * factor, w)
    y = jnp.broadcast_to(y[:, :, :, None], (tb, th * factor, w, factor))
    o_ref[...] = y.reshape(tb, th * factor, w * factor)


def _bcast_tiles(nc, h, w, f, itemsize, target=4 << 20):
    sub = max(8, 32 // max(1, itemsize))
    out_lane = _round_up(w * f, 128)
    per_row = f * out_lane * itemsize                # padded VMEM bytes / input row
    th = max(1, min(h, target // per_row))
    if th < h:
        th = min(h, max(sub, (th // sub) * sub))
    per_slab = th * per_row
    tb = max(1, min(nc, target // max(1, per_slab)))
    return tb, th


def _upscale2d_bcast(x, factor):
    n, c, h, w = x.shape
    f = factor
    nc = n * c
    itemsize = x.dtype.itemsize
    x3 = x.reshape(nc, h, w)                         # free contiguous reshape

    tb, th = _bcast_tiles(nc, h, w, f, itemsize)
    grid = (pl.cdiv(nc, tb), pl.cdiv(h, th))

    in_tile = tb * _round_up(th, 8) * _round_up(w, 128) * itemsize
    out_tile = tb * _round_up(th * f, 8) * _round_up(w * f, 128) * itemsize
    vmem_limit = max(2 * (in_tile + out_tile) + 2 * out_tile + (4 << 20), 16 << 20)

    out = pl.pallas_call(
        functools.partial(_upscale_bcast_kernel, factor=f),
        out_shape=jax.ShapeDtypeStruct((nc, h * f, w * f), x.dtype),
        grid=grid,
        in_specs=[pl.BlockSpec((tb, th, w), lambda i, j: (i, j, 0))],
        out_specs=pl.BlockSpec((tb, th * f, w * f), lambda i, j: (i, j, 0)),
        compiler_params=pltpu.CompilerParams(
            dimension_semantics=("parallel", "parallel"),
            vmem_limit_bytes=int(vmem_limit),
        ),
        cost_estimate=pl.CostEstimate(
            flops=0, transcendentals=0,
            bytes_accessed=(1 + f * f) * x.size * itemsize,
        ),
    )(x3)
    return out.reshape(n, c, h * f, w * f)


# ----------------------------------------------------------------------------
# Public wrapper: equivalent of PyTorch Upscale2d.forward (NCHW in, NCHW out).
# ----------------------------------------------------------------------------
def upscale2d(x, factor: int = 2):
    assert isinstance(factor, int) and factor >= 1
    if factor == 1:
        return x                                     # matches PyTorch short-circuit
    n, c, h, w = x.shape
    f = factor

    rg = None
    if x.dtype.name in ("float32", "bfloat16", "float16"):
        rg = _pick_row_group(n * c * h, w)
        if rg is not None and (rg * w) * (rg * w * f * f) * 2 > (2 << 20):
            rg = None                                # keep the replication matrix small
    if rg is not None:
        return _upscale2d_rowrep_mxu(x, f, rg)
    return _upscale2d_bcast(x, f)


def _upscale2d_ref(x, factor):
    # Pure-JAX reference mirroring the PyTorch view/expand/view semantics.
    if factor == 1:
        return x
    n, c, h, w = x.shape
    x = x.reshape(n, c, h, 1, w, 1)
    x = jnp.broadcast_to(x, (n, c, h, factor, w, factor))
    return x.reshape(n, c, h * factor, w * factor)


if __name__ == "__main__":
    key = jax.random.PRNGKey(0)
    N, C, H, W = 2, 4, 16, 16
    factor = 2

    x = jax.random.normal(key, (N, C, H, W), dtype=jnp.float32)
    out = jax.block_until_ready(upscale2d(x, factor))
    ref = _upscale2d_ref(x, factor)

    assert out.shape == (N, C, H * factor, W * factor), out.shape
    assert out.dtype == x.dtype
    assert jnp.array_equal(out, ref), "Pallas Upscale2d mismatch vs reference (MXU path)"

    # Exercise the secondary (broadcast) path once on a non-float dtype.
    xi = jax.random.randint(jax.random.PRNGKey(1), (2, 3, 8, 8), -100, 100,
                            dtype=jnp.int32)
    outi = jax.block_until_ready(upscale2d(xi, 2))
    assert jnp.array_equal(outi, _upscale2d_ref(xi, 2)), \
        "Pallas Upscale2d mismatch vs reference (broadcast path)"

    print("KERNEL_OK")
</pallas_src>

<mosaic_0001>
module attributes {stable_mosaic.version = 11 : i64} {
  func.func @_rep_matmul_kernel(%arg0: i32, %arg1: memref<16x128xf32, #tpu.memory_space<vmem>>, %arg2: memref<128x512xbf16, #tpu.memory_space<vmem>>, %arg3: memref<16x512xf32, #tpu.memory_space<vmem>>) attributes {dimension_semantics = [#tpu.dimension_semantics<parallel>], iteration_bounds = array<i64: 1>, scalar_prefetch = 0 : i64, scratch_operands = 0 : i64, tpu.core_type = #tpu.core_type<tc>, window_params = [{transform_indices = @transform_0, window_bounds = array<i64: 16, 128>}, {pipeline_mode = #tpu.pipeline_mode<synchronous>, transform_indices = @transform_1, window_bounds = array<i64: 128, 512>}, {transform_indices = @transform_2, window_bounds = array<i64: 16, 512>}]} {
    %c0 = arith.constant 0 : index
    %c0_0 = arith.constant 0 : index
    %0 = vector.load %arg2[%c0, %c0_0] : memref<128x512xbf16, #tpu.memory_space<vmem>>, vector<128x512xbf16>
    %c0_1 = arith.constant 0 : index
    %c0_2 = arith.constant 0 : index
    %1 = vector.load %arg1[%c0_1, %c0_2] : memref<16x128xf32, #tpu.memory_space<vmem>>, vector<16x128xf32>
    %2 = arith.truncf %1 : vector<16x128xf32> to vector<16x128xbf16>
    %3 = arith.extf %2 : vector<16x128xbf16> to vector<16x128xf32>
    %4 = arith.subf %1, %3 : vector<16x128xf32>
    %5 = arith.truncf %4 : vector<16x128xf32> to vector<16x128xbf16>
    %6 = arith.extf %5 : vector<16x128xbf16> to vector<16x128xf32>
    %7 = arith.subf %4, %6 : vector<16x128xf32>
    %8 = arith.truncf %7 : vector<16x128xf32> to vector<16x128xbf16>
    %cst = arith.constant dense<0.000000e+00> : vector<16x512xf32>
    %9 = tpu.matmul %2, %0, %cst {dimension_numbers = #tpu.dot_dimension_numbers<[1], [0], [0], [1], [0, 0, 1, 1], [], []>} : vector<16x128xbf16>, vector<128x512xbf16>, vector<16x512xf32> -> vector<16x512xf32>
    %cst_3 = arith.constant dense<0.000000e+00> : vector<16x512xf32>
    %10 = tpu.matmul %5, %0, %cst_3 {dimension_numbers = #tpu.dot_dimension_numbers<[1], [0], [0], [1], [0, 0, 1, 1], [], []>} : vector<16x128xbf16>, vector<128x512xbf16>, vector<16x512xf32> -> vector<16x512xf32>
    %11 = arith.addf %9, %10 : vector<16x512xf32>
    %cst_4 = arith.constant dense<0.000000e+00> : vector<16x512xf32>
    %12 = tpu.matmul %8, %0, %cst_4 {dimension_numbers = #tpu.dot_dimension_numbers<[1], [0], [0], [1], [0, 0, 1, 1], [], []>} : vector<16x128xbf16>, vector<128x512xbf16>, vector<16x512xf32> -> vector<16x512xf32>
    %13 = arith.addf %11, %12 : vector<16x512xf32>
    %c0_5 = arith.constant 0 : index
    %c0_6 = arith.constant 0 : index
    %14 = vector.load %arg3[%c0_5, %c0_6] : memref<16x512xf32, #tpu.memory_space<vmem>>, vector<16x512xf32>
    tpu.vector_store %arg3[%c0_5, %c0_6], %13 {strides = array<i32>} : memref<16x512xf32, #tpu.memory_space<vmem>>, vector<16x512xf32>,
    return
  }
  func.func @transform_0(%arg0: i32) -> (i32, i32) {
    %c0_i32 = arith.constant 0 : i32
    %c0_i32_0 = arith.constant 0 : i32
    return %arg0, %c0_i32 : i32, i32
  }
  func.func @transform_1(%arg0: i32) -> (i32, i32) {
    %c0_i32 = arith.constant 0 : i32
    %c0_i32_0 = arith.constant 0 : i32
    %c0_i32_1 = arith.constant 0 : i32
    return %c0_i32, %c0_i32_0 : i32, i32
  }
  func.func @transform_2(%arg0: i32) -> (i32, i32) {
    %c0_i32 = arith.constant 0 : i32
    %c0_i32_0 = arith.constant 0 : i32
    return %arg0, %c0_i32 : i32, i32
  }
}

</mosaic_0001>

<llo_original>
// kernel: tpu_custom_call.1
$region0: #{tpu_custom_call.1}
  #allocation0 [shape = 'u32[]', space=smem, size = 0x4, offset = 0x4, fixed_abs, tag = 'smem constant byte address 0x4 - core index']
  #allocation1 [shape = 'u32[144,128]{1,0:T(1,128)}', space=vmem, size = 0x12000, scoped, tag = 'internal scratch']
  %s0 = inlined_call_operand.hbm [shape: f32[16,128], index: 0, kind: input, shape index: {}]
  %s1 = inlined_call_operand.hbm [shape: bf16[128,512], index: 1, kind: input, shape index: {}]
  %s2 = inlined_call_operand.hbm [shape: f32[16,512], index: 2, kind: output, shape index: {}]
  %s3 = sld [smem:[#allocation0]]
  $region26: #{tpu_custom_call.1} parent=0
    _
  %s5 = ssub.s32 1, %s3
  %s6 = scalar_select 0, %s5, %s3
  $region1: #{tpu_custom_call.1} parent=0
    #allocation2 [shape = 'u8[8192]{0}', space=vmem, size = 0x2000, scoped, tag = 'input window, operand 0, single buffered']
    #allocation3 [shape = 's32[1]{0}', space=sflag, size = 0x4, scoped, tag = 'scoped memory for tpu_custom_call.1']
    #allocation4 [shape = 's32[1]{0}', space=sflag, size = 0x4, scoped, tag = 'scoped memory for tpu_custom_call.1']
    #allocation5 [shape = 'u8[131072]{0}', space=vmem, size = 0x20000, scoped, tag = 'input window, operand 1, single buffered']
    #allocation6 [shape = 's32[1]{0}', space=sflag, size = 0x4, scoped, tag = 'scoped memory for tpu_custom_call.1']
    #allocation7 [shape = 'u8[32768]{0}', space=vmem, size = 0x8000, scoped, tag = 'output window, operand 0, single buffered']
    %7 = vsyncpa [#allocation3], 0
    %8 = vsyncpa [#allocation6], 0
    %9 = vsyncpa [#allocation4], 0
    // Predicated region
    $region2: #{tpu_custom_call.1} parent=1 // pred_check
      _
    $region3: #{tpu_custom_call.1} parent=1 // pred_check_branch
      %11 = sbr.rel (0) target = $region5
    $region4: #{tpu_custom_call.1} parent=1 // pred_region
      %s13 = ssub.s32 256, 256
      %14 = vsyncadd [#allocation3], %s13
      %s15 = sshll.u32 [#allocation2], 4
      %s16 = int_to_ptr.vmem [resolvable:$true] %s15
      %21 = dma.hbm_to_vmem [thread:$0]  %s0, 256, %s16, [#allocation3], 128, 128, 8
    $region5: #{tpu_custom_call.1} parent=1 // pred_fallthru
      _
    // Predicated region
    $region6: #{tpu_custom_call.1} parent=1 // pred_check
      _
    $region7: #{tpu_custom_call.1} parent=1 // pred_check_branch
      %23 = sbr.rel (0) target = $region9
    $region8: #{tpu_custom_call.1} parent=1 // pred_region
      %s25 = ssub.s32 4096, 4096
      %26 = vsyncadd [#allocation6], %s25
      %s27 = sshll.u32 [#allocation5], 4
      %s28 = int_to_ptr.vmem [resolvable:$true] %s27
      %33 = dma.hbm_to_vmem [thread:$0]  %s1, 4096, %s28, [#allocation6], 256, 256, 16
    $region9: #{tpu_custom_call.1} parent=1 // pred_fallthru
      _
    // Predicated region
    $region10: #{tpu_custom_call.1} parent=1 // pred_check
      _
    $region11: #{tpu_custom_call.1} parent=1 // pred_check_branch
      %35 = sbr.rel (0) target = $region13
    $region12: #{tpu_custom_call.1} parent=1 // pred_region
      %36 = dma.done [#allocation3], 256
    $region13: #{tpu_custom_call.1} parent=1 // pred_fallthru
      _
    // Predicated region
    $region14: #{tpu_custom_call.1} parent=1 // pred_check
      _
    $region15: #{tpu_custom_call.1} parent=1 // pred_check_branch
      %38 = sbr.rel (0) target = $region17
    $region16: #{tpu_custom_call.1} parent=1 // pred_region
      %39 = dma.done [#allocation6], 4096
    $region17: #{tpu_custom_call.1} parent=1 // pred_fallthru
      _
    %v41 = vld [vmem:[#allocation5] sm:$0xff]
    %v42 = vld [vmem:[#allocation5 + $0x8] sm:$0xff]
    %v43 = vld [vmem:[#allocation5 + $0x10] sm:$0xff]
    %v44 = vld [vmem:[#allocation5 + $0x18] sm:$0xff]
    %v45 = vld [vmem:[#allocation5 + $0x20] sm:$0xff]
    %v46 = vld [vmem:[#allocation5 + $0x28] sm:$0xff]
    %v47 = vld [vmem:[#allocation5 + $0x30] sm:$0xff]
    %v48 = vld [vmem:[#allocation5 + $0x38] sm:$0xff]
    %v49 = vld [vmem:[#allocation5 + $0x40] sm:$0xff]
    %v50 = vld [vmem:[#allocation5 + $0x48] sm:$0xff]
    %v51 = vld [vmem:[#allocation5 + $0x50] sm:$0xff]
    %v52 = vld [vmem:[#allocation5 + $0x58] sm:$0xff]
    %v53 = vld [vmem:[#allocation5 + $0x60] sm:$0xff]
    %v54 = vld [vmem:[#allocation5 + $0x68] sm:$0xff]
    %v55 = vld [vmem:[#allocation5 + $0x70] sm:$0xff]
    %v56 = vld [vmem:[#allocation5 + $0x78] sm:$0xff]
    %v57 = vld [vmem:[#allocation5 + $0x80] sm:$0xff]
    %v58 = vld [vmem:[#allocation5 + $0x88] sm:$0xff]
    %v59 = vld [vmem:[#allocation5 + $0x90] sm:$0xff]
    %v60 = vld [vmem:[#allocation5 + $0x98] sm:$0xff]
    %v61 = vld [vmem:[#allocation5 + $0xa0] sm:$0xff]
    %v62 = vld [vmem:[#allocation5 + $0xa8] sm:$0xff]
    %v63 = vld [vmem:[#allocation5 + $0xb0] sm:$0xff]
    %v64 = vld [vmem:[#allocation5 + $0xb8] sm:$0xff]
    %v65 = vld [vmem:[#allocation5 + $0xc0] sm:$0xff]
    %v66 = vld [vmem:[#allocation5 + $0xc8] sm:$0xff]
    %v67 = vld [vmem:[#allocation5 + $0xd0] sm:$0xff]
    %v68 = vld [vmem:[#allocation5 + $0xd8] sm:$0xff]
    %v69 = vld [vmem:[#allocation5 + $0xe0] sm:$0xff]
    %v70 = vld [vmem:[#allocation5 + $0xe8] sm:$0xff]
    %v71 = vld [vmem:[#allocation5 + $0xf0] sm:$0xff]
    %v72 = vld [vmem:[#allocation5 + $0xf8] sm:$0xff]
    %v73 = vld [vmem:[#allocation2] sm:$0xff]
    %v74 = vld [vmem:[#allocation2 + $0x8] sm:$0xff]
    %v75 = vpack.c.bf16 %v74, %v73
    %v76 = vunpack.c.l.bf16 %v75
    %v77 = vunpack.c.h.bf16 %v75
    %v78 = vsub.f32 %v73, %v76
    %v79 = vsub.f32 %v74, %v77
    %v80 = vpack.c.bf16 %v79, %v78
    %v81 = vunpack.c.l.bf16 %v80
    %v82 = vunpack.c.h.bf16 %v80
    %v83 = vsub.f32 %v78, %v81
    %v84 = vsub.f32 %v79, %v82
    %v85 = vpack.c.bf16 %v84, %v83
    %v118 = vunpack.c.l.b16 %v41
    %v119 = vunpack.c.h.b16 %v41
    %v120 = vunpack.c.l.b16 %v42
    %v121 = vunpack.c.h.b16 %v42
    %v122 = vunpack.c.l.b16 %v43
    %v123 = vunpack.c.h.b16 %v43
    %v124 = vunpack.c.l.b16 %v44
    %v125 = vunpack.c.h.b16 %v44
    %v126 = vunpack.c.l.b16 %v45
    %v127 = vunpack.c.h.b16 %v45
    %v128 = vunpack.c.l.b16 %v46
    %v129 = vunpack.c.h.b16 %v46
    %v130 = vunpack.c.l.b16 %v47
    %v131 = vunpack.c.h.b16 %v47
    %v132 = vunpack.c.l.b16 %v48
    %v133 = vunpack.c.h.b16 %v48
    %v134 = vunpack.c.l.b16 %v49
    %v135 = vunpack.c.h.b16 %v49
    %v136 = vunpack.c.l.b16 %v50
    %v137 = vunpack.c.h.b16 %v50
    %v138 = vunpack.c.l.b16 %v51
    %v139 = vunpack.c.h.b16 %v51
    %v140 = vunpack.c.l.b16 %v52
    %v141 = vunpack.c.h.b16 %v52
    %v142 = vunpack.c.l.b16 %v53
    %v143 = vunpack.c.h.b16 %v53
    %v144 = vunpack.c.l.b16 %v54
    %v145 = vunpack.c.h.b16 %v54
    %v146 = vunpack.c.l.b16 %v55
    %v147 = vunpack.c.h.b16 %v55
    %v148 = vunpack.c.l.b16 %v56
    %v149 = vunpack.c.h.b16 %v56
    %v150 = vunpack.c.l.b16 %v57
    %v151 = vunpack.c.h.b16 %v57
    %v152 = vunpack.c.l.b16 %v58
    %v153 = vunpack.c.h.b16 %v58
    %v154 = vunpack.c.l.b16 %v59
    %v155 = vunpack.c.h.b16 %v59
    %v156 = vunpack.c.l.b16 %v60
    %v157 = vunpack.c.h.b16 %v60
    %v158 = vunpack.c.l.b16 %v61
    %v159 = vunpack.c.h.b16 %v61
    %v160 = vunpack.c.l.b16 %v62
    %v161 = vunpack.c.h.b16 %v62
    %v162 = vunpack.c.l.b16 %v63
    %v163 = vunpack.c.h.b16 %v63
    %v164 = vunpack.c.l.b16 %v64
    %v165 = vunpack.c.h.b16 %v64
    %v166 = vunpack.c.l.b16 %v65
    %v167 = vunpack.c.h.b16 %v65
    %v168 = vunpack.c.l.b16 %v66
    %v169 = vunpack.c.h.b16 %v66
    %v170 = vunpack.c.l.b16 %v67
    %v171 = vunpack.c.h.b16 %v67
    %v172 = vunpack.c.l.b16 %v68
    %v173 = vunpack.c.h.b16 %v68
    %v174 = vunpack.c.l.b16 %v69
    %v175 = vunpack.c.h.b16 %v69
    %v176 = vunpack.c.l.b16 %v70
    %v177 = vunpack.c.h.b16 %v70
    %v178 = vunpack.c.l.b16 %v71
    %v179 = vunpack.c.h.b16 %v71
    %v180 = vunpack.c.l.b16 %v72
    %v181 = vunpack.c.h.b16 %v72
    %v182 = vpack.c.b16 %v122, %v118
    %v183 = vpack.c.b16 %v123, %v119
    %v184 = vpack.c.b16 %v124, %v120
    %v185 = vpack.c.b16 %v125, %v121
    %v186 = vpack.c.b16 %v130, %v126
    %v187 = vpack.c.b16 %v131, %v127
    %v188 = vpack.c.b16 %v132, %v128
    %v189 = vpack.c.b16 %v133, %v129
    %v190 = vpack.c.b16 %v138, %v134
    %v191 = vpack.c.b16 %v139, %v135
    %v192 = vpack.c.b16 %v140, %v136
    %v193 = vpack.c.b16 %v141, %v137
    %v194 = vpack.c.b16 %v146, %v142
    %v195 = vpack.c.b16 %v147, %v143
    %v196 = vpack.c.b16 %v148, %v144
    %v197 = vpack.c.b16 %v149, %v145
    %v198 = vpack.c.b16 %v154, %v150
    %v199 = vpack.c.b16 %v155, %v151
    %v200 = vpack.c.b16 %v156, %v152
    %v201 = vpack.c.b16 %v157, %v153
    %v202 = vpack.c.b16 %v162, %v158
    %v203 = vpack.c.b16 %v163, %v159
    %v204 = vpack.c.b16 %v164, %v160
    %v205 = vpack.c.b16 %v165, %v161
    %v206 = vpack.c.b16 %v170, %v166
    %v207 = vpack.c.b16 %v171, %v167
    %v208 = vpack.c.b16 %v172, %v168
    %v209 = vpack.c.b16 %v173, %v169
    %v210 = vpack.c.b16 %v178, %v174
    %v211 = vpack.c.b16 %v179, %v175
    %v212 = vpack.c.b16 %v180, %v176
    %v213 = vpack.c.b16 %v181, %v177
    %246 = vmatprep.subr.bf16.mxu0 %v211
    %247 = vmatpush1.bf16.msra.mxu0 %v210
    %248 = vmatprep.subr.bf16.mxu0 %v207
    %249 = vmatpush1.bf16.msra.mxu0 %v206
    %250 = vmatprep.subr.bf16.mxu0 %v203
    %251 = vmatpush1.bf16.msra.mxu0 %v202
    %252 = vmatprep.subr.bf16.mxu0 %v199
    %253 = vmatpush1.bf16.msra.mxu0 %v198
    %254 = vmatprep.subr.bf16.mxu0 %v195
    %255 = vmatpush1.bf16.msra.mxu0 %v194
    %256 = vmatprep.subr.bf16.mxu0 %v191
    %257 = vmatpush1.bf16.msra.mxu0 %v190
    %258 = vmatprep.subr.bf16.mxu0 %v187
    %259 = vmatpush1.bf16.msra.mxu0 %v186
    %260 = vmatprep.subr.bf16.mxu0 %v183
    %261 = vmatpush1.bf16.msra.mxu0 %v182
    %262 = vmatprep.subr.bf16.mxu0 0
    %263 = vmatpush2.bf16.msra.mxu0 0
    %264 = vmatprep.subr.bf16.mxu0 0
    %265 = vmatpush2.bf16.msra.mxu0 0
    %266 = vmatprep.subr.bf16.mxu0 0
    %267 = vmatpush2.bf16.msra.mxu0 0
    %268 = vmatprep.subr.bf16.mxu0 0
    %269 = vmatpush2.bf16.msra.mxu0 0
    %270 = vmatprep.subr.bf16.mxu0 0
    %271 = vmatpush2.bf16.msra.mxu0 0
    %272 = vmatprep.subr.bf16.mxu0 0
    %273 = vmatpush2.bf16.msra.mxu0 0
    %274 = vmatprep.subr.bf16.mxu0 0
    %275 = vmatpush2.bf16.msra.mxu0 0
    %276 = vmatprep.subr.bf16.mxu0 0
    %277 = vmatpush2.bf16.msra.mxu0 0
    %278 = vmatprep.mubr.bf16.mxu0 0
    %279 = vmatmul.mubr.bf16.gmra.mxu0 %v80
    %v280 = vpop.f32.mrf.mxu0
    %v281 = vadd.f32 0.0, %v280
    %v282 = vpop.f32.mrf.mxu0
    %v283 = vadd.f32 0.0, %v282
    %v284 = vpop.f32.mrf.mxu0
    %v285 = vadd.f32 0.0, %v284
    %v286 = vpop.f32.mrf.mxu0
    %v287 = vadd.f32 0.0, %v286
    %288 = vdwg.mxu0
    %289 = vmatprep.subr.bf16.mxu0 %v213
    %290 = vmatpush1.bf16.msra.mxu0 %v212
    %291 = vmatprep.subr.bf16.mxu0 %v209
    %292 = vmatpush1.bf16.msra.mxu0 %v208
    %293 = vmatprep.subr.bf16.mxu0 %v205
    %294 = vmatpush1.bf16.msra.mxu0 %v204
    %295 = vmatprep.subr.bf16.mxu0 %v201
    %296 = vmatpush1.bf16.msra.mxu0 %v200
    %297 = vmatprep.subr.bf16.mxu0 %v197
    %298 = vmatpush1.bf16.msra.mxu0 %v196
    %299 = vmatprep.subr.bf16.mxu0 %v193
    %300 = vmatpush1.bf16.msra.mxu0 %v192
    %301 = vmatprep.subr.bf16.mxu0 %v189
    %302 = vmatpush1.bf16.msra.mxu0 %v188
    %303 = vmatprep.subr.bf16.mxu0 %v185
    %304 = vmatpush1.bf16.msra.mxu0 %v184
    %305 = vmatprep.subr.bf16.mxu0 0
    %306 = vmatpush2.bf16.msra.mxu0 0
    %307 = vmatprep.subr.bf16.mxu0 0
    %308 = vmatpush2.bf16.msra.mxu0 0
    %309 = vmatprep.subr.bf16.mxu0 0
    %310 = vmatpush2.bf16.msra.mxu0 0
    %311 = vmatprep.subr.bf16.mxu0 0
    %312 = vmatpush2.bf16.msra.mxu0 0
    %313 = vmatprep.subr.bf16.mxu0 0
    %314 = vmatpush2.bf16.msra.mxu0 0
    %315 = vmatprep.subr.bf16.mxu0 0
    %316 = vmatpush2.bf16.msra.mxu0 0
    %317 = vmatprep.subr.bf16.mxu0 0
    %318 = vmatpush2.bf16.msra.mxu0 0
    %319 = vmatprep.subr.bf16.mxu0 0
    %320 = vmatpush2.bf16.msra.mxu0 0
    %321 = vmatprep.mubr.bf16.mxu0 0
    %322 = vmatmul.mubr.bf16.gmra.mxu0 %v80
    %v323 = vpop.f32.mrf.mxu0
    %v324 = vadd.f32 0.0, %v323
    %v325 = vpop.f32.mrf.mxu0
    %v326 = vadd.f32 0.0, %v325
    %v327 = vpop.f32.mrf.mxu0
    %v328 = vadd.f32 0.0, %v327
    %v329 = vpop.f32.mrf.mxu0
    %v330 = vadd.f32 0.0, %v329
    %331 = vdwg.mxu0
    %332 = vmatprep.subr.bf16.mxu0 %v211
    %333 = vmatpush1.bf16.msra.mxu0 %v210
    %334 = vmatprep.subr.bf16.mxu0 %v207
    %335 = vmatpush1.bf16.msra.mxu0 %v206
    %336 = vmatprep.subr.bf16.mxu0 %v203
    %337 = vmatpush1.bf16.msra.mxu0 %v202
    %338 = vmatprep.subr.bf16.mxu0 %v199
    %339 = vmatpush1.bf16.msra.mxu0 %v198
    %340 = vmatprep.subr.bf16.mxu0 %v195
    %341 = vmatpush1.bf16.msra.mxu0 %v194
    %342 = vmatprep.subr.bf16.mxu0 %v191
    %343 = vmatpush1.bf16.msra.mxu0 %v190
    %344 = vmatprep.subr.bf16.mxu0 %v187
    %345 = vmatpush1.bf16.msra.mxu0 %v186
    %346 = vmatprep.subr.bf16.mxu0 %v183
    %347 = vmatpush1.bf16.msra.mxu0 %v182
    %348 = vmatprep.subr.bf16.mxu0 0
    %349 = vmatpush2.bf16.msra.mxu0 0
    %350 = vmatprep.subr.bf16.mxu0 0
    %351 = vmatpush2.bf16.msra.mxu0 0
    %352 = vmatprep.subr.bf16.mxu0 0
    %353 = vmatpush2.bf16.msra.mxu0 0
    %354 = vmatprep.subr.bf16.mxu0 0
    %355 = vmatpush2.bf16.msra.mxu0 0
    %356 = vmatprep.subr.bf16.mxu0 0
    %357 = vmatpush2.bf16.msra.mxu0 0
    %358 = vmatprep.subr.bf16.mxu0 0
    %359 = vmatpush2.bf16.msra.mxu0 0
    %360 = vmatprep.subr.bf16.mxu0 0
    %361 = vmatpush2.bf16.msra.mxu0 0
    %362 = vmatprep.subr.bf16.mxu0 0
    %363 = vmatpush2.bf16.msra.mxu0 0
    %364 = vmatprep.mubr.bf16.mxu0 0
    %365 = vmatmul.mubr.bf16.gmra.mxu0 %v75
    %v366 = vpop.f32.mrf.mxu0
    %v367 = vadd.f32 %v281, %v366
    %v368 = vpop.f32.mrf.mxu0
    %v369 = vadd.f32 %v283, %v368
    %v370 = vpop.f32.mrf.mxu0
    %v371 = vadd.f32 %v285, %v370
    %v372 = vpop.f32.mrf.mxu0
    %v373 = vadd.f32 %v287, %v372
    %374 = vdwg.mxu0
    %375 = vmatprep.subr.bf16.mxu0 %v213
    %376 = vmatpush1.bf16.msra.mxu0 %v212
    %377 = vmatprep.subr.bf16.mxu0 %v209
    %378 = vmatpush1.bf16.msra.mxu0 %v208
    %379 = vmatprep.subr.bf16.mxu0 %v205
    %380 = vmatpush1.bf16.msra.mxu0 %v204
    %381 = vmatprep.subr.bf16.mxu0 %v201
    %382 = vmatpush1.bf16.msra.mxu0 %v200
    %383 = vmatprep.subr.bf16.mxu0 %v197
    %384 = vmatpush1.bf16.msra.mxu0 %v196
    %385 = vmatprep.subr.bf16.mxu0 %v193
    %386 = vmatpush1.bf16.msra.mxu0 %v192
    %387 = vmatprep.subr.bf16.mxu0 %v189
    %388 = vmatpush1.bf16.msra.mxu0 %v188
    %389 = vmatprep.subr.bf16.mxu0 %v185
    %390 = vmatpush1.bf16.msra.mxu0 %v184
    %391 = vmatprep.subr.bf16.mxu0 0
    %392 = vmatpush2.bf16.msra.mxu0 0
    %393 = vmatprep.subr.bf16.mxu0 0
    %394 = vmatpush2.bf16.msra.mxu0 0
    %395 = vmatprep.subr.bf16.mxu0 0
    %396 = vmatpush2.bf16.msra.mxu0 0
    %397 = vmatprep.subr.bf16.mxu0 0
    %398 = vmatpush2.bf16.msra.mxu0 0
    %399 = vmatprep.subr.bf16.mxu0 0
    %400 = vmatpush2.bf16.msra.mxu0 0
    %401 = vmatprep.subr.bf16.mxu0 0
    %402 = vmatpush2.bf16.msra.mxu0 0
    %403 = vmatprep.subr.bf16.mxu0 0
    %404 = vmatpush2.bf16.msra.mxu0 0
    %405 = vmatprep.subr.bf16.mxu0 0
    %406 = vmatpush2.bf16.msra.mxu0 0
    %407 = vmatprep.mubr.bf16.mxu0 0
    %408 = vmatmul.mubr.bf16.gmra.mxu0 %v75
    %v409 = vpop.f32.mrf.mxu0
    %v410 = vadd.f32 %v324, %v409
    %v411 = vpop.f32.mrf.mxu0
    %v412 = vadd.f32 %v326, %v411
    %v413 = vpop.f32.mrf.mxu0
    %v414 = vadd.f32 %v328, %v413
    %v415 = vpop.f32.mrf.mxu0
    %v416 = vadd.f32 %v330, %v415
    %417 = vdwg.mxu0
    %418 = vmatprep.subr.bf16.mxu0 %v211
    %419 = vmatpush1.bf16.msra.mxu0 %v210
    %420 = vmatprep.subr.bf16.mxu0 %v207
    %421 = vmatpush1.bf16.msra.mxu0 %v206
    %422 = vmatprep.subr.bf16.mxu0 %v203
    %423 = vmatpush1.bf16.msra.mxu0 %v202
    %424 = vmatprep.subr.bf16.mxu0 %v199
    %425 = vmatpush1.bf16.msra.mxu0 %v198
    %426 = vmatprep.subr.bf16.mxu0 %v195
    %427 = vmatpush1.bf16.msra.mxu0 %v194
    %428 = vmatprep.subr.bf16.mxu0 %v191
    %429 = vmatpush1.bf16.msra.mxu0 %v190
    %430 = vmatprep.subr.bf16.mxu0 %v187
    %431 = vmatpush1.bf16.msra.mxu0 %v186
    %432 = vmatprep.subr.bf16.mxu0 %v183
    %433 = vmatpush1.bf16.msra.mxu0 %v182
    %434 = vmatprep.subr.bf16.mxu0 0
    %435 = vmatpush2.bf16.msra.mxu0 0
    %436 = vmatprep.subr.bf16.mxu0 0
    %437 = vmatpush2.bf16.msra.mxu0 0
    %438 = vmatprep.subr.bf16.mxu0 0
    %439 = vmatpush2.bf16.msra.mxu0 0
    %440 = vmatprep.subr.bf16.mxu0 0
    %441 = vmatpush2.bf16.msra.mxu0 0
    %442 = vmatprep.subr.bf16.mxu0 0
    %443 = vmatpush2.bf16.msra.mxu0 0
    %444 = vmatprep.subr.bf16.mxu0 0
    %445 = vmatpush2.bf16.msra.mxu0 0
    %446 = vmatprep.subr.bf16.mxu0 0
    %447 = vmatpush2.bf16.msra.mxu0 0
    %448 = vmatprep.subr.bf16.mxu0 0
    %449 = vmatpush2.bf16.msra.mxu0 0
    %450 = vmatprep.mubr.bf16.mxu0 0
    %451 = vmatmul.mubr.bf16.gmra.mxu0 %v85
    %v452 = vpop.f32.mrf.mxu0
    %v453 = vadd.f32 0.0, %v452
    %v454 = vpop.f32.mrf.mxu0
    %v455 = vadd.f32 0.0, %v454
    %v456 = vpop.f32.mrf.mxu0
    %v457 = vadd.f32 0.0, %v456
    %v458 = vpop.f32.mrf.mxu0
    %v459 = vadd.f32 0.0, %v458
    %460 = vdwg.mxu0
    %461 = vmatprep.subr.bf16.mxu0 %v213
    %462 = vmatpush1.bf16.msra.mxu0 %v212
    %463 = vmatprep.subr.bf16.mxu0 %v209
    %464 = vmatpush1.bf16.msra.mxu0 %v208
    %465 = vmatprep.subr.bf16.mxu0 %v205
    %466 = vmatpush1.bf16.msra.mxu0 %v204
    %467 = vmatprep.subr.bf16.mxu0 %v201
    %468 = vmatpush1.bf16.msra.mxu0 %v200
    %469 = vmatprep.subr.bf16.mxu0 %v197
    %470 = vmatpush1.bf16.msra.mxu0 %v196
    %471 = vmatprep.subr.bf16.mxu0 %v193
    %472 = vmatpush1.bf16.msra.mxu0 %v192
    %473 = vmatprep.subr.bf16.mxu0 %v189
    %474 = vmatpush1.bf16.msra.mxu0 %v188
    %475 = vmatprep.subr.bf16.mxu0 %v185
    %476 = vmatpush1.bf16.msra.mxu0 %v184
    %477 = vmatprep.subr.bf16.mxu0 0
    %478 = vmatpush2.bf16.msra.mxu0 0
    %479 = vmatprep.subr.bf16.mxu0 0
    %480 = vmatpush2.bf16.msra.mxu0 0
    %481 = vmatprep.subr.bf16.mxu0 0
    %482 = vmatpush2.bf16.msra.mxu0 0
    %483 = vmatprep.subr.bf16.mxu0 0
    %484 = vmatpush2.bf16.msra.mxu0 0
    %485 = vmatprep.subr.bf16.mxu0 0
    %486 = vmatpush2.bf16.msra.mxu0 0
    %487 = vmatprep.subr.bf16.mxu0 0
    %488 = vmatpush2.bf16.msra.mxu0 0
    %489 = vmatprep.subr.bf16.mxu0 0
    %490 = vmatpush2.bf16.msra.mxu0 0
    %491 = vmatprep.subr.bf16.mxu0 0
    %492 = vmatpush2.bf16.msra.mxu0 0
    %493 = vmatprep.mubr.bf16.mxu0 0
    %494 = vmatmul.mubr.bf16.gmra.mxu0 %v85
    %v495 = vpop.f32.mrf.mxu0
    %v496 = vadd.f32 0.0, %v495
    %v497 = vpop.f32.mrf.mxu0
    %v498 = vadd.f32 0.0, %v497
    %v499 = vpop.f32.mrf.mxu0
    %v500 = vadd.f32 0.0, %v499
    %v501 = vpop.f32.mrf.mxu0
    %v502 = vadd.f32 0.0, %v501
    %503 = vdwg.mxu0
    %v504 = vadd.f32 %v367, %v453
    %v505 = vadd.f32 %v369, %v455
    %v506 = vadd.f32 %v410, %v496
    %v507 = vadd.f32 %v412, %v498
    %v508 = vadd.f32 %v371, %v457
    %v509 = vadd.f32 %v373, %v459
    %v510 = vadd.f32 %v414, %v500
    %v511 = vadd.f32 %v416, %v502
    %512 = vst [vmem:[#allocation7] sm:$0xff] %v504
    %513 = vst [vmem:[#allocation7 + $0x8] sm:$0xff] %v505
    %514 = vst [vmem:[#allocation7 + $0x10] sm:$0xff] %v506
    %515 = vst [vmem:[#allocation7 + $0x18] sm:$0xff] %v507
    %516 = vst [vmem:[#allocation7 + $0x20] sm:$0xff] %v508
    %517 = vst [vmem:[#allocation7 + $0x28] sm:$0xff] %v509
    %518 = vst [vmem:[#allocation7 + $0x30] sm:$0xff] %v510
    %519 = vst [vmem:[#allocation7 + $0x38] sm:$0xff] %v511
    // Predicated region
    $region18: #{tpu_custom_call.1} parent=1 // pred_check
      _
    $region19: #{tpu_custom_call.1} parent=1 // pred_check_branch
      %521 = sbr.rel (0) target = $region21
    $region20: #{tpu_custom_call.1} parent=1 // pred_region
      %s523 = ssub.s32 1024, 1024
      %524 = vsyncadd [#allocation4], %s523
      %s525 = sshll.u32 [#allocation7], 4
      %s526 = int_to_ptr.vmem [resolvable:$true] %s525
      %531 = dma.vmem_to_hbm [thread:$0]  %s526, 1024, %s2, [#allocation4], 512, 512, 32
    $region21: #{tpu_custom_call.1} parent=1 // pred_fallthru
      _
    // Predicated region
    $region22: #{tpu_custom_call.1} parent=1 // pred_check
      _
    $region23: #{tpu_custom_call.1} parent=1 // pred_check_branch
      %533 = sbr.rel (0) target = $region25
    $region24: #{tpu_custom_call.1} parent=1 // pred_region
      %534 = dma.done [#allocation4], 1024
    $region25: #{tpu_custom_call.1} parent=1 // pred_fallthru
      _
    %535 = vsyncpa [#allocation3], 1
    %536 = vsyncpa [#allocation6], 1
    %537 = vsyncpa [#allocation4], 1

</llo_original>
